<compile_context>
chip_gen: v6e
topology: v6e:2x2x1
jax: 0.10.0
libtpu: 0.0.40
codegen_flags: <defaults>
</compile_context>

<pallas_src>
import functools

import jax
import jax.numpy as jnp
from jax.experimental import pallas as pl
from jax.experimental.pallas import tpu as pltpu


def _round_up(x, m):
    return (x + m - 1) // m * m


def _pick_cout_tile(c_out, max_tile=256):
    """Largest tile <= max_tile that divides C_out (multiple of 8), else full."""
    if c_out <= max_tile:
        return c_out
    for t in range(max_tile, 7, -8):
        if c_out % t == 0:
            return t
    return c_out


def _conv_bn_act_kernel(x_ref, w_ref, shift_ref, o_ref, *scratch,
                        offsets, c_in, lq):
    # x_ref:     (1, C_in, L_in)      zero-padded input, rows flattened on lanes
    # w_ref:     (Ct, K*K*C_in)       BN-scale-folded weights (compute dtype)
    # shift_ref: (Ct, 1) f32          folded BatchNorm shift
    # o_ref:     (1, Ct, LQ)          stride-1 conv output (padded-row geometry)
    # scratch:   optional (K*K*C_in, LQ) VMEM im2col buffer (absent for 1x1)
    if len(offsets) == 1 and offsets[0] == 0:
        # 1x1 conv: the flat input already is the im2col matrix.
        col = x_ref[0, :, :lq]
    else:
        col_ref = scratch[0]
        for t, off in enumerate(offsets):
            # contiguous, lane-dense shifted view of the flat padded input
            col_ref[t * c_in:(t + 1) * c_in, :] = x_ref[0, :, off:off + lq]
        col = col_ref[...]
    # single fused MXU matmul, K*K*C_in-deep contraction, f32 accumulator
    acc = jnp.dot(w_ref[...], col, preferred_element_type=jnp.float32)
    o_ref[0] = jnp.maximum(acc + shift_ref[...], 0.0).astype(o_ref.dtype)


def conv_bn_act(x, conv_w, gamma, beta, running_mean, running_var, *,
                stride=1, eps=1e-5, compute_dtype=jnp.bfloat16, out_dtype=None):
    """x: (B, C_in, H, W) NCHW; conv_w: (C_out, C_in, K, K). Returns NCHW.

    compute_dtype is the MXU operand dtype (precision knob); accumulation is
    always f32.  out_dtype defaults to x.dtype.
    """
    B, C_in, H, W = x.shape
    C_out, C_in_w, K, K2 = conv_w.shape
    assert C_in_w == C_in and K == K2
    out_dtype = x.dtype if out_dtype is None else out_dtype

    pad = K // 2
    W_pad = W + 2 * pad
    H1 = H + 2 * pad - K + 1                     # stride-1 output extent (rows)
    W1 = W + 2 * pad - K + 1                     # stride-1 output extent (cols)

    LQ = _round_up(H1 * W_pad, 128)              # lane-dense output length
    max_off = (K - 1) * W_pad + (K - 1)
    need = max_off + LQ
    H_ext = -(-need // W_pad)                    # total padded rows (>= H + 2*pad)
    L_in = H_ext * W_pad

    # Single wrapper pad: spatial halo + extra bottom rows absorbing the lane
    # tail; the following reshape is free (contiguous).
    # TODO(synk): eliminate this pad entirely by zero-filling a VMEM buffer
    # in-kernel and DMA-ing unpadded rows (memory_space=pl.ANY + async copy).
    xc = x.astype(compute_dtype)
    xp = jnp.pad(xc, ((0, 0), (0, 0), (pad, H_ext - H - pad), (pad, pad)))
    xp = xp.reshape(B, C_in, L_in)

    # Fold inference-mode BatchNorm scale into the conv weights (f32 math,
    # then one cast); keep only the shift for the kernel epilogue.
    scale = (gamma.astype(jnp.float32)
             / jnp.sqrt(running_var.astype(jnp.float32) + eps))
    shift = (beta.astype(jnp.float32)
             - running_mean.astype(jnp.float32) * scale).reshape(C_out, 1)
    w_mat = jnp.transpose(conv_w.astype(jnp.float32)
                          * scale[:, None, None, None],
                          (0, 2, 3, 1)).reshape(C_out, K * K * C_in)
    w_mat = w_mat.astype(compute_dtype)

    offsets = tuple(dy * W_pad + dx for dy in range(K) for dx in range(K))
    KKC = K * K * C_in
    use_col = len(offsets) > 1

    c_tile = _pick_cout_tile(C_out)
    n_ct = C_out // c_tile

    # --- VMEM budget: generation-aware (v7x has 64 MiB/TC, v5e/v6e 128 MiB) ---
    cbytes = jnp.dtype(compute_dtype).itemsize
    obytes = jnp.dtype(out_dtype).itemsize
    in_block = C_in * L_in * cbytes
    out_block = c_tile * LQ * obytes
    col_block = KKC * LQ * cbytes if use_col else 0
    w_block = c_tile * KKC * cbytes
    sh_block = c_tile * 4
    needed = 2 * (in_block + out_block + w_block + sh_block) + col_block
    try:
        vmem_cap = int(pltpu.get_tpu_info().vmem_capacity_bytes)
    except Exception:
        vmem_cap = 64 << 20                      # conservative (v7x per-TC VMEM)
    vmem_limit = int(min(max(int(needed * 1.3), 4 << 20), int(vmem_cap * 0.85)))

    # Advisory cost estimate: what the kernel itself actually touches/computes.
    cost = pl.CostEstimate(
        flops=2 * B * C_out * KKC * LQ,
        transcendentals=0,
        bytes_accessed=(B * C_in * L_in * cbytes
                        + B * C_out * LQ * obytes
                        + C_out * KKC * cbytes + C_out * 4),
    )

    kernel = functools.partial(_conv_bn_act_kernel,
                               offsets=offsets, c_in=C_in, lq=LQ)
    scratch_shapes = ([pltpu.VMEM((KKC, LQ), compute_dtype)] if use_col else [])

    out_flat = pl.pallas_call(
        kernel,
        out_shape=jax.ShapeDtypeStruct((B, C_out, LQ), out_dtype),
        grid_spec=pltpu.PrefetchScalarGridSpec(
            num_scalar_prefetch=0,
            grid=(B, n_ct),
            in_specs=[
                pl.BlockSpec((1, C_in, L_in), lambda b, c: (b, 0, 0)),
                pl.BlockSpec((c_tile, KKC), lambda b, c: (c, 0)),
                pl.BlockSpec((c_tile, 1), lambda b, c: (c, 0)),
            ],
            out_specs=pl.BlockSpec((1, c_tile, LQ), lambda b, c: (b, c, 0)),
            scratch_shapes=scratch_shapes,
        ),
        compiler_params=pltpu.CompilerParams(
            dimension_semantics=("parallel", "parallel"),
            vmem_limit_bytes=vmem_limit,
        ),
        cost_estimate=cost,
    )(xp, w_mat, shift)

    # Drop the lane padding / wrap columns, back to NCHW.
    # TODO(synk): downstream consumers could keep the padded-row geometry and
    # skip this crop (extra XLA read+write of the output).
    out = out_flat[:, :, :H1 * W_pad].reshape(B, C_out, H1, W_pad)[:, :, :, :W1]
    if stride > 1:
        # TODO(synk): stride>1 computes the stride-1 output and subsamples; a
        # space-to-depth phase decomposition (stride-1 over S^2*C_in channels)
        # would avoid the S^2 extra FLOPs and output writes.
        out = out[:, :, ::stride, ::stride]
    return out


def _reference(x, conv_w, gamma, beta, running_mean, running_var,
               *, stride=1, eps=1e-5):
    K = conv_w.shape[-1]
    pad = K // 2
    y = jax.lax.conv_general_dilated(
        x, conv_w, window_strides=(stride, stride),
        padding=((pad, pad), (pad, pad)),
        dimension_numbers=("NCHW", "OIHW", "NCHW"),
        precision=jax.lax.Precision.HIGHEST)
    scale = gamma / jnp.sqrt(running_var + eps)
    shift = beta - running_mean * scale
    y = y * scale[None, :, None, None] + shift[None, :, None, None]
    return jnp.maximum(y, 0.0)


if __name__ == "__main__":
    # small shapes consistent with the module: batch=2, in_chs=4, out_chs=8,
    # kernel_size=3, stride=1, spatial 16x16
    B, C_in, H, W = 2, 4, 16, 16
    C_out, K, stride = 8, 3, 1

    key = jax.random.PRNGKey(0)
    kx, kw, kg, kb, km, kv = jax.random.split(key, 6)
    x = jax.random.normal(kx, (B, C_in, H, W), dtype=jnp.float32)
    conv_w = jax.random.normal(kw, (C_out, C_in, K, K), dtype=jnp.float32) * 0.1
    gamma = jax.random.uniform(kg, (C_out,), jnp.float32, 0.5, 1.5)
    beta = jax.random.normal(kb, (C_out,), dtype=jnp.float32) * 0.1
    running_mean = jax.random.normal(km, (C_out,), dtype=jnp.float32) * 0.1
    running_var = jax.random.uniform(kv, (C_out,), jnp.float32, 0.5, 1.5)

    out = conv_bn_act(x, conv_w, gamma, beta, running_mean, running_var,
                      stride=stride)
    out = jax.block_until_ready(out)

    ref = _reference(x, conv_w, gamma, beta, running_mean, running_var,
                     stride=stride)
    assert out.shape == ref.shape == (B, C_out, H, W)
    # bf16 matmul operands (f32 accumulation) vs. f32 HIGHEST-precision
    # reference: tolerance sized for bf16 input rounding.
    assert jnp.allclose(out.astype(jnp.float32), ref, atol=5e-2, rtol=5e-2), \
        "mismatch vs reference"
    print("KERNEL_OK")
</pallas_src>

<mosaic_0001>
module attributes {stable_mosaic.version = 11 : i64} {
  func.func @_conv_bn_act_kernel(%arg0: i32, %arg1: i32, %arg2: memref<1x4x432xbf16, #tpu.memory_space<vmem>>, %arg3: memref<8x36xbf16, #tpu.memory_space<vmem>>, %arg4: memref<8x1xf32, #tpu.memory_space<vmem>>, %arg5: memref<1x8x384xf32, #tpu.memory_space<vmem>>, %arg6: memref<36x384xbf16, #tpu.memory_space<vmem>>) attributes {dimension_semantics = [#tpu.dimension_semantics<parallel>, #tpu.dimension_semantics<parallel>], iteration_bounds = array<i64: 2, 1>, scalar_prefetch = 0 : i64, scratch_operands = 1 : i64, tpu.core_type = #tpu.core_type<tc>, window_params = [{transform_indices = @transform_0, window_bounds = array<i64: 1, 4, 432>}, {transform_indices = @transform_1, window_bounds = array<i64: 8, 36>}, {transform_indices = @transform_2, window_bounds = array<i64: 8, 1>}, {transform_indices = @transform_3, window_bounds = array<i64: 1, 8, 384>}]} {
    %c0 = arith.constant 0 : index
    %c0_0 = arith.constant 0 : index
    %c0_1 = arith.constant 0 : index
    %0 = vector.load %arg2[%c0, %c0_0, %c0_1] : memref<1x4x432xbf16, #tpu.memory_space<vmem>>, vector<1x4x384xbf16>
    %1 = vector.shape_cast %0 : vector<1x4x384xbf16> to vector<4x384xbf16>
    %c0_2 = arith.constant 0 : index
    %c0_3 = arith.constant 0 : index
    %2 = vector.load %arg6[%c0_2, %c0_3] : memref<36x384xbf16, #tpu.memory_space<vmem>>, vector<4x384xbf16>
    tpu.vector_store %arg6[%c0_2, %c0_3], %1 {strides = array<i32>} : memref<36x384xbf16, #tpu.memory_space<vmem>>, vector<4x384xbf16>,
    %c0_4 = arith.constant 0 : index
    %c0_5 = arith.constant 0 : index
    %c1 = arith.constant 1 : index
    %3 = vector.load %arg2[%c0_4, %c0_5, %c1] : memref<1x4x432xbf16, #tpu.memory_space<vmem>>, vector<1x4x384xbf16>
    %4 = vector.shape_cast %3 : vector<1x4x384xbf16> to vector<4x384xbf16>
    %c4 = arith.constant 4 : index
    %c0_6 = arith.constant 0 : index
    %5 = vector.load %arg6[%c4, %c0_6] : memref<36x384xbf16, #tpu.memory_space<vmem>>, vector<4x384xbf16>
    tpu.vector_store %arg6[%c4, %c0_6], %4 {strides = array<i32>} : memref<36x384xbf16, #tpu.memory_space<vmem>>, vector<4x384xbf16>,
    %c0_7 = arith.constant 0 : index
    %c0_8 = arith.constant 0 : index
    %c2 = arith.constant 2 : index
    %6 = vector.load %arg2[%c0_7, %c0_8, %c2] : memref<1x4x432xbf16, #tpu.memory_space<vmem>>, vector<1x4x384xbf16>
    %7 = vector.shape_cast %6 : vector<1x4x384xbf16> to vector<4x384xbf16>
    %c8 = arith.constant 8 : index
    %c0_9 = arith.constant 0 : index
    %8 = vector.load %arg6[%c8, %c0_9] : memref<36x384xbf16, #tpu.memory_space<vmem>>, vector<4x384xbf16>
    tpu.vector_store %arg6[%c8, %c0_9], %7 {strides = array<i32>} : memref<36x384xbf16, #tpu.memory_space<vmem>>, vector<4x384xbf16>,
    %c0_10 = arith.constant 0 : index
    %c0_11 = arith.constant 0 : index
    %c18 = arith.constant 18 : index
    %9 = vector.load %arg2[%c0_10, %c0_11, %c18] : memref<1x4x432xbf16, #tpu.memory_space<vmem>>, vector<1x4x384xbf16>
    %10 = vector.shape_cast %9 : vector<1x4x384xbf16> to vector<4x384xbf16>
    %c12 = arith.constant 12 : index
    %c0_12 = arith.constant 0 : index
    %11 = vector.load %arg6[%c12, %c0_12] : memref<36x384xbf16, #tpu.memory_space<vmem>>, vector<4x384xbf16>
    tpu.vector_store %arg6[%c12, %c0_12], %10 {strides = array<i32>} : memref<36x384xbf16, #tpu.memory_space<vmem>>, vector<4x384xbf16>,
    %c0_13 = arith.constant 0 : index
    %c0_14 = arith.constant 0 : index
    %c19 = arith.constant 19 : index
    %12 = vector.load %arg2[%c0_13, %c0_14, %c19] : memref<1x4x432xbf16, #tpu.memory_space<vmem>>, vector<1x4x384xbf16>
    %13 = vector.shape_cast %12 : vector<1x4x384xbf16> to vector<4x384xbf16>
    %c16 = arith.constant 16 : index
    %c0_15 = arith.constant 0 : index
    %14 = vector.load %arg6[%c16, %c0_15] : memref<36x384xbf16, #tpu.memory_space<vmem>>, vector<4x384xbf16>
    tpu.vector_store %arg6[%c16, %c0_15], %13 {strides = array<i32>} : memref<36x384xbf16, #tpu.memory_space<vmem>>, vector<4x384xbf16>,
    %c0_16 = arith.constant 0 : index
    %c0_17 = arith.constant 0 : index
    %c20 = arith.constant 20 : index
    %15 = vector.load %arg2[%c0_16, %c0_17, %c20] : memref<1x4x432xbf16, #tpu.memory_space<vmem>>, vector<1x4x384xbf16>
    %16 = vector.shape_cast %15 : vector<1x4x384xbf16> to vector<4x384xbf16>
    %c20_18 = arith.constant 20 : index
    %c0_19 = arith.constant 0 : index
    %17 = vector.load %arg6[%c20_18, %c0_19] : memref<36x384xbf16, #tpu.memory_space<vmem>>, vector<4x384xbf16>
    tpu.vector_store %arg6[%c20_18, %c0_19], %16 {strides = array<i32>} : memref<36x384xbf16, #tpu.memory_space<vmem>>, vector<4x384xbf16>,
    %c0_20 = arith.constant 0 : index
    %c0_21 = arith.constant 0 : index
    %c36 = arith.constant 36 : index
    %18 = vector.load %arg2[%c0_20, %c0_21, %c36] : memref<1x4x432xbf16, #tpu.memory_space<vmem>>, vector<1x4x384xbf16>
    %19 = vector.shape_cast %18 : vector<1x4x384xbf16> to vector<4x384xbf16>
    %c24 = arith.constant 24 : index
    %c0_22 = arith.constant 0 : index
    %20 = vector.load %arg6[%c24, %c0_22] : memref<36x384xbf16, #tpu.memory_space<vmem>>, vector<4x384xbf16>
    tpu.vector_store %arg6[%c24, %c0_22], %19 {strides = array<i32>} : memref<36x384xbf16, #tpu.memory_space<vmem>>, vector<4x384xbf16>,
    %c0_23 = arith.constant 0 : index
    %c0_24 = arith.constant 0 : index
    %c37 = arith.constant 37 : index
    %21 = vector.load %arg2[%c0_23, %c0_24, %c37] : memref<1x4x432xbf16, #tpu.memory_space<vmem>>, vector<1x4x384xbf16>
    %22 = vector.shape_cast %21 : vector<1x4x384xbf16> to vector<4x384xbf16>
    %c28 = arith.constant 28 : index
    %c0_25 = arith.constant 0 : index
    %23 = vector.load %arg6[%c28, %c0_25] : memref<36x384xbf16, #tpu.memory_space<vmem>>, vector<4x384xbf16>
    tpu.vector_store %arg6[%c28, %c0_25], %22 {strides = array<i32>} : memref<36x384xbf16, #tpu.memory_space<vmem>>, vector<4x384xbf16>,
    %c0_26 = arith.constant 0 : index
    %c0_27 = arith.constant 0 : index
    %c38 = arith.constant 38 : index
    %24 = vector.load %arg2[%c0_26, %c0_27, %c38] : memref<1x4x432xbf16, #tpu.memory_space<vmem>>, vector<1x4x384xbf16>
    %25 = vector.shape_cast %24 : vector<1x4x384xbf16> to vector<4x384xbf16>
    %c32 = arith.constant 32 : index
    %c0_28 = arith.constant 0 : index
    %26 = vector.load %arg6[%c32, %c0_28] : memref<36x384xbf16, #tpu.memory_space<vmem>>, vector<4x384xbf16>
    tpu.vector_store %arg6[%c32, %c0_28], %25 {strides = array<i32>} : memref<36x384xbf16, #tpu.memory_space<vmem>>, vector<4x384xbf16>,
    %c0_29 = arith.constant 0 : index
    %c0_30 = arith.constant 0 : index
    %27 = vector.load %arg6[%c0_29, %c0_30] : memref<36x384xbf16, #tpu.memory_space<vmem>>, vector<36x384xbf16>
    %c0_31 = arith.constant 0 : index
    %c0_32 = arith.constant 0 : index
    %28 = vector.load %arg3[%c0_31, %c0_32] : memref<8x36xbf16, #tpu.memory_space<vmem>>, vector<8x36xbf16>
    %cst = arith.constant dense<0.000000e+00> : vector<8x384xf32>
    %29 = tpu.matmul %28, %27, %cst {dimension_numbers = #tpu.dot_dimension_numbers<[1], [0], [0], [1], [0, 0, 1, 1], [], []>} : vector<8x36xbf16>, vector<36x384xbf16>, vector<8x384xf32> -> vector<8x384xf32>
    %c0_33 = arith.constant 0 : index
    %c0_34 = arith.constant 0 : index
    %30 = vector.load %arg4[%c0_33, %c0_34] : memref<8x1xf32, #tpu.memory_space<vmem>>, vector<8x1xf32>
    %31 = vector.broadcast %30 : vector<8x1xf32> to vector<8x384xf32>
    %32 = arith.addf %29, %31 : vector<8x384xf32>
    %cst_35 = arith.constant 0.000000e+00 : f32
    %33 = vector.broadcast %cst_35 : f32 to vector<8x384xf32>
    %34 = arith.maximumf %32, %33 : vector<8x384xf32>
    %c0_36 = arith.constant 0 : index
    %c0_37 = arith.constant 0 : index
    %c0_38 = arith.constant 0 : index
    %35 = vector.load %arg5[%c0_36, %c0_37, %c0_38] : memref<1x8x384xf32, #tpu.memory_space<vmem>>, vector<1x8x384xf32>
    %36 = vector.shape_cast %35 : vector<1x8x384xf32> to vector<8x384xf32>
    %37 = vector.shape_cast %34 : vector<8x384xf32> to vector<1x8x384xf32>
    tpu.vector_store %arg5[%c0_36, %c0_37, %c0_38], %37 {strides = array<i32>} : memref<1x8x384xf32, #tpu.memory_space<vmem>>, vector<1x8x384xf32>,
    return
  }
  func.func @transform_0(%arg0: i32, %arg1: i32) -> (i32, i32, i32) {
    %c0_i32 = arith.constant 0 : i32
    %c0_i32_0 = arith.constant 0 : i32
    %c0_i32_1 = arith.constant 0 : i32
    return %arg0, %c0_i32, %c0_i32_0 : i32, i32, i32
  }
  func.func @transform_1(%arg0: i32, %arg1: i32) -> (i32, i32) {
    %c0_i32 = arith.constant 0 : i32
    %c0_i32_0 = arith.constant 0 : i32
    return %arg1, %c0_i32 : i32, i32
  }
  func.func @transform_2(%arg0: i32, %arg1: i32) -> (i32, i32) {
    %c0_i32 = arith.constant 0 : i32
    %c0_i32_0 = arith.constant 0 : i32
    return %arg1, %c0_i32 : i32, i32
  }
  func.func @transform_3(%arg0: i32, %arg1: i32) -> (i32, i32, i32) {
    %c0_i32 = arith.constant 0 : i32
    %c0_i32_0 = arith.constant 0 : i32
    return %arg0, %arg1, %c0_i32 : i32, i32, i32
  }
}

</mosaic_0001>

<llo_original>
// kernel: tpu_custom_call.1
$region0: #{tpu_custom_call.1}
  #allocation0 [shape = 'u32[]', space=smem, size = 0x4, offset = 0x4, fixed_abs, tag = 'smem constant byte address 0x4 - core index']
  #allocation1 [shape = 'u32[144,128]{1,0:T(1,128)}', space=vmem, size = 0x12000, scoped, tag = 'internal scratch']
  #allocation2 [shape = 'bf16[36,384]{1,0:T(8,128)(2,1)}', space=vmem, size = 0x7800, scoped, tag = 'scratch operand']
  %s0 = inlined_call_operand.hbm [shape: bf16[2,4,432], index: 0, kind: input, shape index: {}]
  %s1 = inlined_call_operand.vmem [shape: bf16[8,36], index: 1, kind: input, shape index: {}]
  %s2 = inlined_call_operand.vmem [shape: f32[8,1], index: 2, kind: input, shape index: {}]
  %s3 = inlined_call_operand.hbm [shape: f32[2,8,384], index: 3, kind: output, shape index: {}]
  %s4 = sld [smem:[#allocation0]]
  $region49: #{tpu_custom_call.1} parent=0
    _
  %s6 = ssub.s32 1, %s4
  %s7 = scalar_select 0, %s6, %s4
  $region1: #{tpu_custom_call.1} parent=0
    #allocation3 [shape = 'u8[8192]{0}', space=vmem, size = 0x2000, scoped, tag = 'input window, operand 0']
    #allocation4 [shape = 's32[2]{0}', space=sflag, size = 0x8, scoped, tag = 'scoped memory for tpu_custom_call.1']
    #allocation5 [shape = 's32[2]{0}', space=sflag, size = 0x8, scoped, tag = 'scoped memory for tpu_custom_call.1']
    #allocation6 [shape = 'u8[24576]{0}', space=vmem, size = 0x6000, scoped, tag = 'output window, operand 0']
    %8 = vsyncpa [#allocation4], 0
    %s9 = scalar_lea.sflag [#allocation4], 1
    %10 = vsyncpa %s9, 0
    %11 = vsyncpa [#allocation5], 0
    %s12 = scalar_lea.sflag [#allocation5], 1
    %13 = vsyncpa %s12, 0
    loop: start=0, step=1, limit=4
    $region2: #{tpu_custom_call.1} parent=1 // loop_pre_header
      _
    $region3: #{tpu_custom_call.1} parent=1 // loop_header
      %s15 = sphi 0, %s19
      %p16 = scmp.ge.s32.totalorder %s15, 4
      %s22 = sphi 0, %s34
      %s23 = sphi 0, %s30
      %s24 = sphi 0, %s22
      %s25 = sphi 0, %s23
      %s26 = sphi 0, %s24
      %s27 = sphi 0, %s25
      %s37 = sphi 0, %s39
      %s40 = sphi 0, %s37
      %s41 = sphi 0, %s40
      %s57 = sphi 0, %s41
      %s63 = sphi 0, %s65
      %s66 = sphi 0, %s63
      %s67 = sphi 0, %s66
      %s83 = sphi 0, %s67
      %s89 = sphi 0, %s91
      %s92 = sphi 0, %s89
      %s93 = sphi 0, %s92
      %s109 = sphi 0, %s93
      %s117 = sphi 0, %s119
      %s120 = sphi 0, %s117
      %s121 = sphi 0, %s120
      %s137 = sphi 0, %s121
    $region4: #{tpu_custom_call.1} parent=1 // loop_header_branch
      %18 = sbr.rel (%p16) target = $region8
    $region5: #{tpu_custom_call.1} parent=1 // loop_body
      %s20 = ssub.s32 %s15, 1
      %s21 = ssub.s32 %s15, 2
      %s28 = sadd.s32 1, %s23
      %p29 = scmp.ge.s32.totalorder %s28, 1
      %s30 = scalar_select %p29, 0, %s28
      %s31 = sadd.s32 1, %s22
      %s32 = scalar_select %p29, %s31, %s22
      %p33 = scmp.ge.s32.totalorder %s32, 2
      %s34 = scalar_select %p33, 0, %s32
      %s35 = ssub.s32 %s22, %s34
      %p36 = scmp.eq.s32.totalorder %s35, 0
      %s38 = sadd.s32 %s37, 1
      %s39 = scalar_select %p36, %s37, %s38
      %p42 = pneg %p36
      %p43 = scmp.eq.s32.totalorder %s15, 1
      %p44 = por %p42, %p43
      %p45 = scmp.ne.s32.totalorder %s37, %s40
      %p46 = scmp.eq.s32.totalorder %s15, 0
      %p47 = por %p45, %p46
      %p48 = scmp.ne.s32.totalorder %s37, %s40
      %p49 = scmp.eq.s32.totalorder %s20, 1
      %p50 = por %p48, %p49
      %p51 = scmp.ne.s32.totalorder %s40, %s41
      %p52 = scmp.eq.s32.totalorder %s20, 0
      %p53 = por %p51, %p52
      %p54 = scmp.ne.s32.totalorder %s40, %s41
      %p55 = scmp.eq.s32.totalorder %s21, 1
      %p56 = por %p54, %p55
      %p58 = scmp.ne.s32.totalorder %s41, %s57
      %p59 = scmp.eq.s32.totalorder %s21, 0
      %p60 = por %p58, %p59
      %s61 = ssub.s32 %s23, %s30
      %p62 = scmp.eq.s32.totalorder %s61, 0
      %s64 = sadd.s32 %s63, 1
      %s65 = scalar_select %p62, %s63, %s64
      %p68 = pneg %p62
      %p69 = scmp.eq.s32.totalorder %s15, 1
      %p70 = por %p68, %p69
      %p71 = scmp.ne.s32.totalorder %s63, %s66
      %p72 = scmp.eq.s32.totalorder %s15, 0
      %p73 = por %p71, %p72
      %p74 = scmp.ne.s32.totalorder %s63, %s66
      %p75 = scmp.eq.s32.totalorder %s20, 1
      %p76 = por %p74, %p75
      %p77 = scmp.ne.s32.totalorder %s66, %s67
      %p78 = scmp.eq.s32.totalorder %s20, 0
      %p79 = por %p77, %p78
      %p80 = scmp.ne.s32.totalorder %s66, %s67
      %p81 = scmp.eq.s32.totalorder %s21, 1
      %p82 = por %p80, %p81
      %p84 = scmp.ne.s32.totalorder %s67, %s83
      %p85 = scmp.eq.s32.totalorder %s21, 0
      %p86 = por %p84, %p85
      %s87 = ssub.s32 %s23, %s30
      %p88 = scmp.eq.s32.totalorder %s87, 0
      %s90 = sadd.s32 %s89, 1
      %s91 = scalar_select %p88, %s89, %s90
      %p94 = pneg %p88
      %p95 = scmp.eq.s32.totalorder %s15, 1
      %p96 = por %p94, %p95
      %p97 = scmp.ne.s32.totalorder %s89, %s92
      %p98 = scmp.eq.s32.totalorder %s15, 0
      %p99 = por %p97, %p98
      %p100 = scmp.ne.s32.totalorder %s89, %s92
      %p101 = scmp.eq.s32.totalorder %s20, 1
      %p102 = por %p100, %p101
      %p103 = scmp.ne.s32.totalorder %s92, %s93
      %p104 = scmp.eq.s32.totalorder %s20, 0
      %p105 = por %p103, %p104
      %p106 = scmp.ne.s32.totalorder %s92, %s93
      %p107 = scmp.eq.s32.totalorder %s21, 1
      %p108 = por %p106, %p107
      %p110 = scmp.ne.s32.totalorder %s93, %s109
      %p111 = scmp.eq.s32.totalorder %s21, 0
      %p112 = por %p110, %p111
      %s113 = ssub.s32 %s22, %s34
      %s114 = ssub.s32 %s23, %s30
      %s115 = sor.u32 %s113, %s114
      %p116 = scmp.eq.s32.totalorder %s115, 0
      %s118 = sadd.s32 %s117, 1
      %s119 = scalar_select %p116, %s117, %s118
      %p122 = pneg %p116
      %p123 = scmp.eq.s32.totalorder %s15, 1
      %p124 = por %p122, %p123
      %p125 = scmp.ne.s32.totalorder %s117, %s120
      %p126 = scmp.eq.s32.totalorder %s15, 0
      %p127 = por %p125, %p126
      %p128 = scmp.ne.s32.totalorder %s117, %s120
      %p129 = scmp.eq.s32.totalorder %s20, 1
      %p130 = por %p128, %p129
      %p131 = scmp.ne.s32.totalorder %s120, %s121
      %p132 = scmp.eq.s32.totalorder %s20, 0
      %p133 = por %p131, %p132
      %p134 = scmp.ne.s32.totalorder %s120, %s121
      %p135 = scmp.eq.s32.totalorder %s21, 1
      %p136 = por %p134, %p135
      %p138 = scmp.ne.s32.totalorder %s121, %s137
      %p139 = scmp.eq.s32.totalorder %s21, 0
      %p140 = por %p138, %p139
      %p141 = scmp.le.s32.totalorder 1, %s15
      %p142 = scmp.lt.s32.totalorder %s15, 3
      %p143 = pnand %p141, %p142
      %p144 = pneg %p143
      // Predicated region
      $region9: #{tpu_custom_call.1} parent=5 // pred_check
        _
      $region10: #{tpu_custom_call.1} parent=5 // pred_check_branch
        %146 = sbr.rel (%p143) target = $region12
      $region11: #{tpu_custom_call.1} parent=5 // pred_region
        %s147 = ssub.s32 %s15, 1
        // Predicated region
        $region13: #{tpu_custom_call.1} parent=11 // pred_check
          %p148 = pneg %p79
        $region14: #{tpu_custom_call.1} parent=11 // pred_check_branch
          %150 = sbr.rel (%p148) target = $region16
        $region15: #{tpu_custom_call.1} parent=11 // pred_region
          %p151 = scmp.lt.s32.totalorder %s25, 0
          %s152 = scalar_select %p151, %s25, 0
          %s153 = smul.addr %s152, 4
          %s154 = scalar_lea.vmem %s1, %s153
        $region16: #{tpu_custom_call.1} parent=11 // pred_fallthru
          _
        // Predicated region
        $region17: #{tpu_custom_call.1} parent=11 // pred_check
          %p155 = pneg %p105
        $region18: #{tpu_custom_call.1} parent=11 // pred_check_branch
          %157 = sbr.rel (%p155) target = $region20
        $region19: #{tpu_custom_call.1} parent=11 // pred_region
          %p158 = scmp.lt.s32.totalorder %s25, 0
          %s159 = scalar_select %p158, %s25, 0
          %s160 = smul.addr %s159, 8
          %s161 = scalar_lea.vmem %s2, %s160
        $region20: #{tpu_custom_call.1} parent=11 // pred_fallthru
          _
      $region12: #{tpu_custom_call.1} parent=5 // pred_fallthru
        _
      %p162 = scmp.lt.s32.totalorder %s15, 2
      // Predicated region
      $region21: #{tpu_custom_call.1} parent=5 // pred_check
        %p163 = pneg %p162
      $region22: #{tpu_custom_call.1} parent=5 // pred_check_branch
        %165 = sbr.rel (%p163) target = $region24
      $region23: #{tpu_custom_call.1} parent=5 // pred_region
        // Predicated region
        $region25: #{tpu_custom_call.1} parent=23 // pred_check
          %p166 = pneg %p47
        $region26: #{tpu_custom_call.1} parent=23 // pred_check_branch
          %168 = sbr.rel (%p166) target = $region28
        $region27: #{tpu_custom_call.1} parent=23 // pred_region
          %s169 = sand.u32 %s37, 1
          %s170 = scalar_lea.sflag [#allocation4], %s169
          %s171 = sand.u32 %s37, 1
          %s172 = smul.addr %s171, 8
          %s173 = scalar_lea.vmem [#allocation3], %s172
          %s175 = ssub.s32 128, 128
          %176 = vsyncadd %s170, %s175
          %s177 = smul.addr %s22, 4
          %s178 = smul.addr %s177, 32
          %s179 = scalar_lea.hbm %s0, %s178
          %s181 = sshll.u32 %s173, 4
          %s182 = int_to_ptr.vmem [resolvable:$true] %s181
          %184 = dma.hbm_to_vmem [thread:$0]  %s179, 128, %s182, %s170
        $region28: #{tpu_custom_call.1} parent=23 // pred_fallthru
          _
      $region24: #{tpu_custom_call.1} parent=5 // pred_fallthru
        _
      %p185 = scmp.le.s32.totalorder 1, %s15
      %p186 = scmp.lt.s32.totalorder %s15, 3
      %p187 = pnand %p185, %p186
      %p188 = pneg %p187
      // Predicated region
      $region29: #{tpu_custom_call.1} parent=5 // pred_check
        _
      $region30: #{tpu_custom_call.1} parent=5 // pred_check_branch
        %190 = sbr.rel (%p187) target = $region32
      $region31: #{tpu_custom_call.1} parent=5 // pred_region
        %s191 = ssub.s32 %s15, 1
        %s192 = sand.u32 %s40, 1
        %s193 = scalar_lea.sflag [#allocation4], %s192
        %s194 = sand.u32 %s40, 1
        %s195 = smul.addr %s194, 8
        %s196 = scalar_lea.vmem [#allocation3], %s195
        // Predicated region
        $region33: #{tpu_custom_call.1} parent=31 // pred_check
          %p197 = pneg %p53
        $region34: #{tpu_custom_call.1} parent=31 // pred_check_branch
          %199 = sbr.rel (%p197) target = $region36
        $region35: #{tpu_custom_call.1} parent=31 // pred_region
          %200 = dma.done %s193, 128
        $region36: #{tpu_custom_call.1} parent=31 // pred_fallthru
          _
        %s201 = sand.u32 %s40, 1
        %s202 = scalar_lea.sflag [#allocation4], %s201
        %s203 = sand.u32 %s40, 1
        %s204 = smul.addr %s203, 8
        %s205 = scalar_lea.vmem [#allocation3], %s204
        %p206 = pneg %p53
        %p207 = pneg %p50
        %p208 = scmp.lt.s32.totalorder %s25, 0
        %s209 = scalar_select %p208, %s25, 0
        %s210 = smul.addr %s209, 4
        %s211 = scalar_lea.vmem %s1, %s210
        %p212 = pneg %p79
        %p213 = pneg %p76
        %p214 = scmp.lt.s32.totalorder %s25, 0
        %s215 = scalar_select %p214, %s25, 0
        %s216 = smul.addr %s215, 8
        %s217 = scalar_lea.vmem %s2, %s216
        %p218 = pneg %p105
        %p219 = pneg %p102
        %p220 = pneg %p133
        %p221 = pneg %p130
        %s222 = sand.u32 %s120, 1
        %s223 = scalar_lea.sflag [#allocation5], %s222
        %s224 = sand.u32 %s120, 1
        %s225 = smul.addr %s224, 24
        %s226 = scalar_lea.vmem [#allocation6], %s225
        %p227 = scmp.lt.s32.totalorder %s25, 0
        %s228 = scalar_select %p227, %s25, 0
        %s229 = smul.addr %s228, 4
        %s230 = scalar_lea.vmem %s1, %s229
        %p231 = scmp.lt.s32.totalorder %s25, 0
        %s232 = scalar_select %p231, %s25, 0
        %s233 = smul.addr %s232, 8
        %s234 = scalar_lea.vmem %s2, %s233
        %v236 = vld [vmem:[%s196] sm:$0x3f]
        %v238 = vcombine.high %v236, %v236
        %v240 = vunpack.c.l.s4 1983009808
        %v241 = vunpack.c.0.s8 %v240
        %v242 = vlaneseq
        %v243 = vshrl.u32 %v242, 7
        %v244 = vsub.s32 %v241, %v243
        %v245 = vrot.slane %v236, %v244
        %v247 = vunpack.c.l.s4 1983009808
        %v248 = vunpack.c.0.s8 %v247
        %v249 = vlaneseq
        %v250 = vshrl.u32 %v249, 7
        %v251 = vsub.s32 %v248, %v250
        %v252 = vrot.slane %v238, %v251
        %255 = vst [vmem:[#allocation2] sm:$0x33] %v245
        %256 = vst [vmem:[#allocation2 + $0x8] sm:$0x3] %v252
        %v257 = vld [vmem:[%s196] sm:$0xff]
        %v259 = vcombine.low %v257, %v257
        %v261 = vunpack.c.l.s4 1983009808
        %v262 = vunpack.c.0.s8 %v261
        %v263 = vlaneseq
        %v264 = vshrl.u32 %v263, 7
        %v265 = vsub.s32 %v262, %v264
        %v266 = vrot.slane %v259, %v265
        %v268 = vunpack.c.l.s4 1983009808
        %v269 = vunpack.c.0.s8 %v268
        %v270 = vlaneseq
        %v271 = vshrl.u32 %v270, 7
        %v272 = vsub.s32 %v269, %v271
        %v273 = vrot.slane %v257, %v272
        %274 = vrot.lane.b32.xlu0 %v266, 127
        %v275 = vpop.permute.xlu0 %274
        %276 = vrot.lane.b32.xlu0 %v273, 127
        %v277 = vpop.permute.xlu0 %276
        %v278 = vrot.slane %v275, 4
        %v279 = vrot.slane %v277, 4
        %vm280 = vcmask 1043456
        %v281 = vsel %vm280, %v278, %v279
        %vm282 = vcmask 1039360
        %v283 = vsel %vm282, %v275, %v281
        %v284 = vsel %vm282, %v277, %v279
        %287 = vst [vmem:[#allocation2] sm:$0xcc] %v283
        %288 = vst [vmem:[#allocation2 + $0x8] sm:$0xc] %v284
        %v289 = vld [vmem:[%s196] sm:$0xff]
        %v291 = vcombine.high %v289, %v289
        %v293 = vunpack.c.l.s4 1983009808
        %v294 = vunpack.c.0.s8 %v293
        %v295 = vlaneseq
        %v296 = vshrl.u32 %v295, 7
        %v297 = vsub.s32 %v294, %v296
        %v298 = vrot.slane %v289, %v297
        %v300 = vunpack.c.l.s4 1983009808
        %v301 = vunpack.c.0.s8 %v300
        %v302 = vlaneseq
        %v303 = vshrl.u32 %v302, 7
        %v304 = vsub.s32 %v301, %v303
        %v305 = vrot.slane %v291, %v304
        %306 = vrot.lane.b32.xlu0 %v298, 126
        %v307 = vpop.permute.xlu0 %306
        %308 = vrot.lane.b32.xlu0 %v305, 126
        %v309 = vpop.permute.xlu0 %308
        %v310 = vrot.slane %v307, 4
        %v311 = vrot.slane %v309, 4
        %v312 = vsel %vm280, %v310, %v311
        %vm313 = vcmask 1031168
        %v314 = vsel %vm313, %v307, %v312
        %v315 = vsel %vm313, %v309, %v311
        %318 = vst [vmem:[#allocation2 + $0xc] sm:$0x33] %v314
        %319 = vst [vmem:[#allocation2 + $0x14] sm:$0x3] %v315
        %v320 = vld [vmem:[%s196] sm:$0xff]
        %v322 = vcombine.low %v320, %v320
        %v324 = vunpack.c.l.s4 1983009808
        %v325 = vunpack.c.0.s8 %v324
        %v326 = vlaneseq
        %v327 = vshrl.u32 %v326, 7
        %v328 = vsub.s32 %v325, %v327
        %v329 = vrot.slane %v322, %v328
        %v331 = vunpack.c.l.s4 1983009808
        %v332 = vunpack.c.0.s8 %v331
        %v333 = vlaneseq
        %v334 = vshrl.u32 %v333, 7
        %v335 = vsub.s32 %v332, %v334
        %v336 = vrot.slane %v320, %v335
        %337 = vrot.lane.b32.xlu0 %v329, 110
        %v338 = vpop.permute.xlu0 %337
        %339 = vrot.lane.b32.xlu0 %v336, 110
        %v340 = vpop.permute.xlu0 %339
        %v341 = vrot.slane %v338, 4
        %v342 = vrot.slane %v340, 4
        %v343 = vsel %vm280, %v341, %v342
        %vm344 = vcmask 900096
        %v345 = vsel %vm344, %v338, %v343
        %v346 = vsel %vm344, %v340, %v342
        %349 = vst [vmem:[#allocation2 + $0xc] sm:$0xcc] %v345
        %350 = vst [vmem:[#allocation2 + $0x14] sm:$0xc] %v346
        %v351 = vld [vmem:[%s196] sm:$0xff]
        %v353 = vcombine.high %v351, %v351
        %v355 = vunpack.c.l.s4 1983009808
        %v356 = vunpack.c.0.s8 %v355
        %v357 = vlaneseq
        %v358 = vshrl.u32 %v357, 7
        %v359 = vsub.s32 %v356, %v358
        %v360 = vrot.slane %v351, %v359
        %v362 = vunpack.c.l.s4 1983009808
        %v363 = vunpack.c.0.s8 %v362
        %v364 = vlaneseq
        %v365 = vshrl.u32 %v364, 7
        %v366 = vsub.s32 %v363, %v365
        %v367 = vrot.slane %v353, %v366
        %368 = vrot.lane.b32.xlu0 %v360, 109
        %v369 = vpop.permute.xlu0 %368
        %370 = vrot.lane.b32.xlu0 %v367, 109
        %v371 = vpop.permute.xlu0 %370
        %v372 = vrot.slane %v369, 4
        %v373 = vrot.slane %v371, 4
        %v374 = vsel %vm280, %v372, %v373
        %vm375 = vcmask 891904
        %v376 = vsel %vm375, %v369, %v374
        %v377 = vsel %vm375, %v371, %v373
        %380 = vst [vmem:[#allocation2 + $0x18] sm:$0x33] %v376
        %381 = vst [vmem:[#allocation2 + $0x20] sm:$0x3] %v377
        %v382 = vld [vmem:[%s196] sm:$0xff]
        %v384 = vcombine.low %v382, %v382
        %v386 = vunpack.c.l.s4 1983009808
        %v387 = vunpack.c.0.s8 %v386
        %v388 = vlaneseq
        %v389 = vshrl.u32 %v388, 7
        %v390 = vsub.s32 %v387, %v389
        %v391 = vrot.slane %v384, %v390
        %v393 = vunpack.c.l.s4 1983009808
        %v394 = vunpack.c.0.s8 %v393
        %v395 = vlaneseq
        %v396 = vshrl.u32 %v395, 7
        %v397 = vsub.s32 %v394, %v396
        %v398 = vrot.slane %v382, %v397
        %399 = vrot.lane.b32.xlu0 %v391, 108
        %v400 = vpop.permute.xlu0 %399
        %401 = vrot.lane.b32.xlu0 %v398, 108
        %v402 = vpop.permute.xlu0 %401
        %v403 = vrot.slane %v400, 4
        %v404 = vrot.slane %v402, 4
        %v405 = vsel %vm280, %v403, %v404
        %vm406 = vcmask 883712
        %v407 = vsel %vm406, %v400, %v405
        %v408 = vsel %vm406, %v402, %v404
        %411 = vst [vmem:[#allocation2 + $0x18] sm:$0xcc] %v407
        %412 = vst [vmem:[#allocation2 + $0x20] sm:$0xc] %v408
        %v413 = vld [vmem:[%s196] sm:$0xff]
        %v415 = vcombine.high %v413, %v413
        %v417 = vunpack.c.l.s4 1983009808
        %v418 = vunpack.c.0.s8 %v417
        %v419 = vlaneseq
        %v420 = vshrl.u32 %v419, 7
        %v421 = vsub.s32 %v418, %v420
        %v422 = vrot.slane %v413, %v421
        %v424 = vunpack.c.l.s4 1983009808
        %v425 = vunpack.c.0.s8 %v424
        %v426 = vlaneseq
        %v427 = vshrl.u32 %v426, 7
        %v428 = vsub.s32 %v425, %v427
        %v429 = vrot.slane %v415, %v428
        %430 = vrot.lane.b32.xlu0 %v422, 92
        %v431 = vpop.permute.xlu0 %430
        %432 = vrot.lane.b32.xlu0 %v429, 92
        %v433 = vpop.permute.xlu0 %432
        %v434 = vrot.slane %v431, 4
        %v435 = vrot.slane %v433, 4
        %v436 = vsel %vm280, %v434, %v435
        %vm437 = vcmask 752640
        %v438 = vsel %vm437, %v431, %v436
        %v439 = vsel %vm437, %v433, %v435
        %442 = vst [vmem:[#allocation2 + $0x24] sm:$0x33] %v438
        %443 = vst [vmem:[#allocation2 + $0x2c] sm:$0x3] %v439
        %v444 = vld [vmem:[%s196] sm:$0xff]
        %v446 = vcombine.low %v444, %v444
        %v448 = vunpack.c.l.s4 1983009808
        %v449 = vunpack.c.0.s8 %v448
        %v450 = vlaneseq
        %v451 = vshrl.u32 %v450, 7
        %v452 = vsub.s32 %v449, %v451
        %v453 = vrot.slane %v446, %v452
        %v455 = vunpack.c.l.s4 1983009808
        %v456 = vunpack.c.0.s8 %v455
        %v457 = vlaneseq
        %v458 = vshrl.u32 %v457, 7
        %v459 = vsub.s32 %v456, %v458
        %v460 = vrot.slane %v444, %v459
        %461 = vrot.lane.b32.xlu0 %v453, 91
        %v462 = vpop.permute.xlu0 %461
        %463 = vrot.lane.b32.xlu0 %v460, 91
        %v464 = vpop.permute.xlu0 %463
        %v465 = vrot.slane %v462, 4
        %v466 = vrot.slane %v464, 4
        %v467 = vsel %vm280, %v465, %v466
        %vm468 = vcmask 744448
        %v469 = vsel %vm468, %v462, %v467
        %v470 = vsel %vm468, %v464, %v466
        %473 = vst [vmem:[#allocation2 + $0x24] sm:$0xcc] %v469
        %474 = vst [vmem:[#allocation2 + $0x2c] sm:$0xc] %v470
        %v475 = vld [vmem:[%s196] sm:$0xff]
        %v477 = vcombine.high %v475, %v475
        %v479 = vunpack.c.l.s4 1983009808
        %v480 = vunpack.c.0.s8 %v479
        %v481 = vlaneseq
        %v482 = vshrl.u32 %v481, 7
        %v483 = vsub.s32 %v480, %v482
        %v484 = vrot.slane %v475, %v483
        %v486 = vunpack.c.l.s4 1983009808
        %v487 = vunpack.c.0.s8 %v486
        %v488 = vlaneseq
        %v489 = vshrl.u32 %v488, 7
        %v490 = vsub.s32 %v487, %v489
        %v491 = vrot.slane %v477, %v490
        %492 = vrot.lane.b32.xlu0 %v484, 90
        %v493 = vpop.permute.xlu0 %492
        %494 = vrot.lane.b32.xlu0 %v491, 90
        %v495 = vpop.permute.xlu0 %494
        %v496 = vrot.slane %v493, 4
        %v497 = vrot.slane %v495, 4
        %v498 = vsel %vm280, %v496, %v497
        %vm499 = vcmask 736256
        %v500 = vsel %vm499, %v493, %v498
        %v501 = vsel %vm499, %v495, %v497
        %504 = vst [vmem:[#allocation2 + $0x30] sm:$0x33] %v500
        %505 = vst [vmem:[#allocation2 + $0x38] sm:$0x3] %v501
        %v506 = vld [vmem:[#allocation2] sm:$0xff]
        %v507 = vld [vmem:[#allocation2 + $0x8] sm:$0xf]
        %v508 = vld [vmem:[#allocation2 + $0xc] sm:$0xff]
        %v509 = vld [vmem:[#allocation2 + $0x14] sm:$0xf]
        %v510 = vld [vmem:[#allocation2 + $0x18] sm:$0xff]
        %v511 = vld [vmem:[#allocation2 + $0x20] sm:$0xf]
        %v512 = vld [vmem:[#allocation2 + $0x24] sm:$0xff]
        %v513 = vld [vmem:[#allocation2 + $0x2c] sm:$0xf]
        %v514 = vld [vmem:[#allocation2 + $0x30] sm:$0x33]
        %v515 = vld [vmem:[#allocation2 + $0x38] sm:$0x3]
        %v516 = vld [vmem:[%s230] sm:$0xf]
        %v517 = vld [vmem:[%s234] sm:$0xff]
        %519 = vset.pattern.permute.xlu0 0
        %520 = vperm.xlu0 %519, %v517
        %v521 = vpop.permute.xlu0 %520
        %v533 = vunpack.c.l.b16 %v506
        %v534 = vunpack.c.h.b16 %v506
        %v535 = vunpack.c.l.b16 %v507
        %v536 = vunpack.c.l.b16 %v508
        %v537 = vunpack.c.h.b16 %v508
        %v538 = vunpack.c.l.b16 %v509
        %v539 = vunpack.c.l.b16 %v510
        %v540 = vunpack.c.h.b16 %v510
        %v541 = vunpack.c.l.b16 %v511
        %v542 = vunpack.c.l.b16 %v512
        %v543 = vunpack.c.h.b16 %v512
        %v544 = vunpack.c.l.b16 %v513
        %v545 = vunpack.c.l.b16 %v514
        %v546 = vunpack.c.h.b16 %v514
        %v547 = vunpack.c.l.b16 %v515
        %v548 = vpack.c.b16 %v536, %v533
        %v549 = vpack.c.b16 %v537, %v534
        %v550 = vpack.c.b16 %v538, %v535
        %v551 = vpack.c.b16 %v542, %v539
        %v552 = vpack.c.b16 %v543, %v540
        %v553 = vpack.c.b16 %v544, %v541
        %v554 = vpack.c.b16 %v545, %v545
        %v555 = vpack.c.b16 %v546, %v546
        %v556 = vpack.c.b16 %v547, %v547
        %vm563 = vcmask 293888
        %v565 = vsel %vm563, %v516, 0
        %vm567 = vcmask 1041408
        %v569 = vsel %vm567, %v554, 0
        %v572 = vsel %vm567, %v555, 0
        %v575 = vsel %vm567, %v556, 0
        %577 = vmatprep.subr.bf16.mxu0 0
        %578 = vmatpush1.bf16.msra.mxu0 0
        %579 = vmatprep.subr.bf16.mxu0 0
        %580 = vmatpush1.bf16.msra.mxu0 0
        %581 = vmatprep.subr.bf16.mxu0 0
        %582 = vmatpush1.bf16.msra.mxu0 0
        %583 = vmatprep.subr.bf16.mxu0 0
        %584 = vmatpush1.bf16.msra.mxu0 0
        %585 = vmatprep.subr.bf16.mxu0 0
        %586 = vmatpush1.bf16.msra.mxu0 0
        %587 = vmatprep.subr.bf16.mxu0 %v572
        %588 = vmatpush1.bf16.msra.mxu0 %v569
        %589 = vmatprep.subr.bf16.mxu0 %v552
        %590 = vmatpush1.bf16.msra.mxu0 %v551
        %591 = vmatprep.subr.bf16.mxu0 %v549
        %592 = vmatpush1.bf16.msra.mxu0 %v548
        %593 = vmatprep.subr.bf16.mxu0 0
        %594 = vmatpush2.bf16.msra.mxu0 0
        %595 = vmatprep.subr.bf16.mxu0 0
        %596 = vmatpush2.bf16.msra.mxu0 0
        %597 = vmatprep.subr.bf16.mxu0 0
        %598 = vmatpush2.bf16.msra.mxu0 0
        %599 = vmatprep.subr.bf16.mxu0 0
        %600 = vmatpush2.bf16.msra.mxu0 0
        %601 = vmatprep.subr.bf16.mxu0 0
        %602 = vmatpush2.bf16.msra.mxu0 0
        %603 = vmatprep.subr.bf16.mxu0 0
        %604 = vmatpush2.bf16.msra.mxu0 0
        %605 = vmatprep.subr.bf16.mxu0 0
        %606 = vmatpush2.bf16.msra.mxu0 0
        %607 = vmatprep.subr.bf16.mxu0 0
        %608 = vmatpush2.bf16.msra.mxu0 0
        %609 = vmatprep.mubr.bf16.mxu0 0
        %610 = vmatmul.mubr.bf16.gmra.mxu0 %v565
        %v611 = vpop.f32.mrf.mxu0
        %v612 = vadd.f32 %v521, %v611
        %v613 = vpop.f32.mrf.mxu0
        %v614 = vadd.f32 %v521, %v613
        %v615 = vpop.f32.mrf.mxu0
        %v616 = vpop.f32.mrf.mxu0
        %617 = vdwg.mxu0
        %618 = vmatprep.subr.bf16.mxu0 0
        %619 = vmatpush1.bf16.msra.mxu0 0
        %620 = vmatprep.subr.bf16.mxu0 0
        %621 = vmatpush1.bf16.msra.mxu0 0
        %622 = vmatprep.subr.bf16.mxu0 0
        %623 = vmatpush1.bf16.msra.mxu0 0
        %624 = vmatprep.subr.bf16.mxu0 0
        %625 = vmatpush1.bf16.msra.mxu0 0
        %626 = vmatprep.subr.bf16.mxu0 0
        %627 = vmatpush1.bf16.msra.mxu0 0
        %628 = vmatprep.subr.bf16.mxu0 0
        %629 = vmatpush1.bf16.msra.mxu0 %v575
        %630 = vmatprep.subr.bf16.mxu0 0
        %631 = vmatpush1.bf16.msra.mxu0 %v553
        %632 = vmatprep.subr.bf16.mxu0 0
        %633 = vmatpush1.bf16.msra.mxu0 %v550
        %634 = vmatprep.subr.bf16.mxu0 0
        %635 = vmatpush2.bf16.msra.mxu0 0
        %636 = vmatprep.subr.bf16.mxu0 0
        %637 = vmatpush2.bf16.msra.mxu0 0
        %638 = vmatprep.subr.bf16.mxu0 0
        %639 = vmatpush2.bf16.msra.mxu0 0
        %640 = vmatprep.subr.bf16.mxu0 0
        %641 = vmatpush2.bf16.msra.mxu0 0
        %642 = vmatprep.subr.bf16.mxu0 0
        %643 = vmatpush2.bf16.msra.mxu0 0
        %644 = vmatprep.subr.bf16.mxu0 0
        %645 = vmatpush2.bf16.msra.mxu0 0
        %646 = vmatprep.subr.bf16.mxu0 0
        %647 = vmatpush2.bf16.msra.mxu0 0
        %648 = vmatprep.subr.bf16.mxu0 0
        %649 = vmatpush2.bf16.msra.mxu0 0
        %650 = vmatprep.mubr.bf16.mxu0 0
        %651 = vmatmul.mubr.bf16.gmra.mxu0 %v565
        %v652 = vpop.f32.mrf.mxu0
        %v653 = vadd.f32 %v521, %v652
        %v654 = vpop.f32.mrf.mxu0
        %v655 = vpop.f32.mrf.mxu0
        %v656 = vpop.f32.mrf.mxu0
        %657 = vdwg.mxu0
        %v658 = vmax.f32 %v612, 0.0
        %v659 = vmax.f32 %v614, 0.0
        %v660 = vmax.f32 %v653, 0.0
        %661 = vst [vmem:[%s226] sm:$0xff] %v658
        %662 = vst [vmem:[%s226 + $0x8] sm:$0xff] %v659
        %663 = vst [vmem:[%s226 + $0x10] sm:$0xff] %v660
        %s664 = sand.u32 %s120, 1
        %s665 = scalar_lea.sflag [#allocation5], %s664
        %s666 = sand.u32 %s120, 1
        %s667 = smul.addr %s666, 24
        %s668 = scalar_lea.vmem [#allocation6], %s667
        // Predicated region
        $region37: #{tpu_custom_call.1} parent=31 // pred_check
          %p669 = pneg %p130
        $region38: #{tpu_custom_call.1} parent=31 // pred_check_branch
          %671 = sbr.rel (%p669) target = $region40
        $region39: #{tpu_custom_call.1} parent=31 // pred_region
          %s673 = ssub.s32 384, 384
          %674 = vsyncadd %s665, %s673
          %s675 = smul.addr %s25, 3
          %s676 = smul.addr %s24, 3
          %s677 = sadd.s32 %s675, %s676
          %s678 = smul.addr %s677, 128
          %s679 = scalar_lea.hbm %s3, %s678
          %s681 = sshll.u32 %s668, 4
          %s682 = int_to_ptr.vmem [resolvable:$true] %s681
          %684 = dma.vmem_to_hbm [thread:$0]  %s682, 384, %s679, %s665
        $region40: #{tpu_custom_call.1} parent=31 // pred_fallthru
          _
      $region32: #{tpu_custom_call.1} parent=5 // pred_fallthru
        _
      %p685 = scmp.le.s32.totalorder 2, %s15
      // Predicated region
      $region41: #{tpu_custom_call.1} parent=5 // pred_check
        %p686 = pneg %p685
      $region42: #{tpu_custom_call.1} parent=5 // pred_check_branch
        %688 = sbr.rel (%p686) target = $region44
      $region43: #{tpu_custom_call.1} parent=5 // pred_region
        %s689 = ssub.s32 %s15, 2
        // Predicated region
        $region45: #{tpu_custom_call.1} parent=43 // pred_check
          %p690 = pneg %p136
        $region46: #{tpu_custom_call.1} parent=43 // pred_check_branch
          %692 = sbr.rel (%p690) target = $region48
        $region47: #{tpu_custom_call.1} parent=43 // pred_region
          %s693 = sand.u32 %s121, 1
          %s694 = scalar_lea.sflag [#allocation5], %s693
          %s695 = sand.u32 %s121, 1
          %s696 = smul.addr %s695, 24
          %s697 = scalar_lea.vmem [#allocation6], %s696
          %698 = dma.done %s694, 384
        $region48: #{tpu_custom_call.1} parent=43 // pred_fallthru
          _
      $region44: #{tpu_custom_call.1} parent=5 // pred_fallthru
        _
    $region6: #{tpu_custom_call.1} parent=1 // loop_footer
      %s19 = sadd.s32 1, %s15
    $region7: #{tpu_custom_call.1} parent=1 // loop_footer_branch
      %14 = sbr.rel target = $region3
    $region8: #{tpu_custom_call.1} parent=1 // loop_exit
      _
    %699 = vsyncpa [#allocation4], 1
    %s700 = scalar_lea.sflag [#allocation4], 1
    %701 = vsyncpa %s700, 1
    %702 = vsyncpa [#allocation5], 1
    %s703 = scalar_lea.sflag [#allocation5], 1
    %704 = vsyncpa %s703, 1

</llo_original>
